<compile_context>
chip_gen: v7x
topology: tpu7x:2x2x1
jax: 0.10.0
libtpu: 0.0.40
codegen_flags: <defaults>
</compile_context>

<pallas_src>
import functools
import math

import jax
import jax.numpy as jnp
from jax.experimental import pallas as pl
from jax.experimental.pallas import tpu as pltpu


def _round_up(x, m):
    return ((x + m - 1) // m) * m


def make_ncf_kernel(mf_dim, mlp_dim, n_layers):
    """Fused NCF forward kernel; activations are (features, batch) tiles."""

    def kernel(*args):
        # args (refs):
        #   0                : slab  (2*mf + 2*mlp, bt) f32
        #                      rows [0:mf)        = user MF embedding
        #                      rows [mf:2mf)      = movie MF embedding
        #                      rows [2mf:2mf+2mlp)= concat(user MLP, movie MLP)
        #   1..2             : W0 (out0, 2*mlp) bf16, b0 (out0, 1) f32
        #   3..3+2L-1        : [W_i (out_i, in_i) bf16, b_i (out_i, 1) f32] * L
        #   next 3           : wf_mf (mf, 1), wf_mlp (mlp, 1), bf (1, 1)  f32
        #   last             : out (1, bt) f32 (lane-dense)
        slab_ref = args[0]
        w0_ref, b0_ref = args[1], args[2]
        hidden = args[3:3 + 2 * n_layers]
        wf_mf_ref, wf_mlp_ref, bf_ref = args[3 + 2 * n_layers:6 + 2 * n_layers]
        out_ref = args[-1]

        # GMF branch: elementwise product of MF embeddings (f32, VPU).
        u_mf = slab_ref[0:mf_dim, :]
        m_mf = slab_ref[mf_dim:2 * mf_dim, :]
        gmf = u_mf * m_mf                                        # (mf, bt)

        # MLP tower, batch on lanes: x = W @ X (+ bias broadcast over lanes).
        # First Linear has no activation (matches the PyTorch Sequential).
        mlp_in = slab_ref[2 * mf_dim:2 * mf_dim + 2 * mlp_dim, :]
        x = jnp.dot(w0_ref[...], mlp_in.astype(jnp.bfloat16),
                    preferred_element_type=jnp.float32) + b0_ref[...]
        for i in range(n_layers):
            w_ref = hidden[2 * i]
            b_ref = hidden[2 * i + 1]
            # Dropout is identity in eval -> Linear -> ReLU.
            x = jnp.dot(w_ref[...], x.astype(jnp.bfloat16),
                        preferred_element_type=jnp.float32) + b_ref[...]
            x = jnp.maximum(x, 0.0)

        # NeuMF head: concat(gmf, x) @ Wf^T + bf done as broadcast-multiply +
        # sublane (axis 0) reductions -> natively a (1, bt) lane-dense row.
        head = (jnp.sum(gmf * wf_mf_ref[...], axis=0, keepdims=True)
                + jnp.sum(x * wf_mlp_ref[...], axis=0, keepdims=True))
        out_ref[...] = head + bf_ref[...]

    return kernel


def init_ncf_params(key, user_size, movie_size, mf_dim, mlp_dim, n_layers):
    """Parameter init mirroring the PyTorch __init__.

    Embedding tables are pre-concatenated per entity ([MF | MLP] columns).
    Linear weights are stored PyTorch-native (out_features, in_features);
    biases as (out_features, 1) columns (kernel computes W @ X + b).
    """
    keys = jax.random.split(key, 6 + n_layers)
    p = {}
    # Embeddings: normal(std=0.01), then concatenated at param-prep time.
    u_mf = 0.01 * jax.random.normal(keys[0], (user_size, mf_dim), jnp.float32)
    m_mf = 0.01 * jax.random.normal(keys[1], (movie_size, mf_dim), jnp.float32)
    u_mlp = 0.01 * jax.random.normal(keys[2], (user_size, mlp_dim), jnp.float32)
    m_mlp = 0.01 * jax.random.normal(keys[3], (movie_size, mlp_dim), jnp.float32)
    p["user_table"] = jnp.concatenate([u_mf, u_mlp], axis=1)    # (U, mf+mlp)
    p["movie_table"] = jnp.concatenate([m_mf, m_mlp], axis=1)   # (M, mf+mlp)

    # MLP tower: Xavier-normal weights, zero bias.
    times = 2 ** n_layers
    in_dim, out_dim = 2 * mlp_dim, mlp_dim * times
    std = math.sqrt(2.0 / (in_dim + out_dim))
    p["mlp_W0"] = std * jax.random.normal(keys[4], (out_dim, in_dim), jnp.float32)
    p["mlp_b0"] = jnp.zeros((out_dim, 1), jnp.float32)
    p["mlp_hidden"] = []
    for i in range(n_layers):
        in_dim = mlp_dim * times
        out_dim = mlp_dim * (times // 2)
        std = math.sqrt(2.0 / (in_dim + out_dim))
        W = std * jax.random.normal(keys[5 + i], (out_dim, in_dim), jnp.float32)
        b = jnp.zeros((out_dim, 1), jnp.float32)
        p["mlp_hidden"].append((W, b))
        times //= 2

    # NeuMF head: kaiming_normal(a=1, 'sigmoid') -> gain 1, std = 1/sqrt(fan_in).
    in_dim = mf_dim + mlp_dim
    std = 1.0 / math.sqrt(in_dim)
    p["neumf_W"] = std * jax.random.normal(keys[5 + n_layers], (1, in_dim), jnp.float32)
    p["neumf_b"] = jnp.zeros((1, 1), jnp.float32)
    return p


@functools.partial(jax.jit,
                   static_argnames=("mf_dim", "mlp_dim", "n_layers", "block_rows"))
def ncf_forward(params, user_ids, movie_ids, *, mf_dim, mlp_dim, n_layers,
                block_rows=4096):
    B = user_ids.shape[0]
    F = 2 * mf_dim + 2 * mlp_dim

    # ---- Batch tiling (batch lives on lanes). ----
    b128 = _round_up(B, 128)
    if b128 <= 128:
        bt = 128
    else:
        # >= 2 tiles so the "parallel" axis can shard across TCs (v7x megacore),
        # capped at block_rows (fits every generation's scoped-VMEM default).
        bt = max(128, min(block_rows, _round_up(pl.cdiv(B, 2), 128)))
    n_tiles = pl.cdiv(B, bt)
    b_pad = n_tiles * bt

    # ---- Embedding gather + slab build (glue; XLA fuses gather/concat/pad/T).
    u = jnp.take(params["user_table"], user_ids, axis=0)       # (B, mf+mlp)
    m = jnp.take(params["movie_table"], movie_ids, axis=0)     # (B, mf+mlp)
    feats = jnp.concatenate(
        [u[:, :mf_dim], m[:, :mf_dim], u[:, mf_dim:], m[:, mf_dim:]], axis=1)
    feats = jnp.pad(feats, ((0, b_pad - B), (0, 0)))            # deterministic pad
    slab = feats.T.astype(jnp.float32)                          # (F, b_pad)

    # ---- Weights: bf16 for MXU operands, biases / head vectors in f32. ----
    w0 = params["mlp_W0"].astype(jnp.bfloat16)
    b0 = params["mlp_b0"]
    hidden = [(W.astype(jnp.bfloat16), b) for (W, b) in params["mlp_hidden"]]
    Wf = params["neumf_W"]                                      # (1, mf+mlp) f32
    wf_mf = Wf[0, :mf_dim].reshape(mf_dim, 1)
    wf_mlp = Wf[0, mf_dim:].reshape(mlp_dim, 1)
    bf = params["neumf_b"]                                      # (1, 1)

    def resident(arr):
        # Weight/bias: full-array block, constant index_map -> stays in VMEM
        # across all grid steps (no per-step DMA).
        nd = arr.ndim
        return pl.BlockSpec(arr.shape, lambda i, _nd=nd: (0,) * _nd)

    kernel_inputs = [slab, w0, b0]
    in_specs = [
        # Single batch-tiled, lane-dense activation block (one DMA per step).
        # If an xprof trace ever shows exposed input DMA, add
        # pipeline_mode=pl.Buffered(3) here.
        pl.BlockSpec((F, bt), lambda i: (0, i)),
        resident(w0),
        resident(b0),
    ]
    for (W, b) in hidden:
        kernel_inputs += [W, b]
        in_specs += [resident(W), resident(b)]
    kernel_inputs += [wf_mf, wf_mlp, bf]
    in_specs += [resident(wf_mf), resident(wf_mlp), resident(bf)]

    out = pl.pallas_call(
        make_ncf_kernel(mf_dim, mlp_dim, n_layers),
        out_shape=jax.ShapeDtypeStruct((1, b_pad), jnp.float32),  # lane-dense slab
        grid=(n_tiles,),
        in_specs=in_specs,
        out_specs=pl.BlockSpec((1, bt), lambda i: (0, i)),
        compiler_params=pltpu.CompilerParams(
            dimension_semantics=("parallel",)),
    )(*kernel_inputs)

    # .view(-1) in PyTorch; drop the padded tail columns.
    return out.reshape(-1)[:B]


def ncf_reference(params, user_ids, movie_ids, *, mf_dim, mlp_dim, n_layers):
    """Pure-JAX f32 reference mirroring the PyTorch forward (eval mode)."""
    u = jnp.take(params["user_table"], user_ids, axis=0)
    m = jnp.take(params["movie_table"], movie_ids, axis=0)
    gmf = u[:, :mf_dim] * m[:, :mf_dim]
    x = jnp.concatenate([u[:, mf_dim:], m[:, mf_dim:]], axis=-1)
    x = x @ params["mlp_W0"].T + params["mlp_b0"].reshape(1, -1)
    for (W, b) in params["mlp_hidden"]:
        x = jnp.maximum(x @ W.T + b.reshape(1, -1), 0.0)
    neumf = jnp.concatenate([gmf, x], axis=-1)
    out = neumf @ params["neumf_W"].T + params["neumf_b"].reshape(1, -1)
    return out.reshape(-1)


if __name__ == "__main__":
    # Small, module-consistent shapes (exercises multi-tile + padded tail).
    B = 200
    user_size, movie_size = 32, 48
    mf_dim, mlp_dim, n_layers = 8, 8, 2   # opt.ncf_mf_embedding / ncf_mlp_embedding / ncf_layers
    # opt.dropout is irrelevant in eval mode (identity).

    key = jax.random.PRNGKey(0)
    pkey, ukey, mkey = jax.random.split(key, 3)
    params = init_ncf_params(pkey, user_size, movie_size, mf_dim, mlp_dim, n_layers)

    user_ids = jax.random.randint(ukey, (B,), 0, user_size, dtype=jnp.int32)
    movie_ids = jax.random.randint(mkey, (B,), 0, movie_size, dtype=jnp.int32)

    out = ncf_forward(params, user_ids, movie_ids,
                      mf_dim=mf_dim, mlp_dim=mlp_dim, n_layers=n_layers)
    out = jax.block_until_ready(out)

    assert out.shape == (B,), out.shape
    assert out.dtype == jnp.float32
    assert bool(jnp.all(jnp.isfinite(out)))

    # Tolerance check vs. f32 reference (bf16 MXU operands -> small drift).
    ref = ncf_reference(params, user_ids, movie_ids,
                        mf_dim=mf_dim, mlp_dim=mlp_dim, n_layers=n_layers)
    assert bool(jnp.allclose(out, ref, atol=1e-3, rtol=5e-2)), \
        (float(jnp.max(jnp.abs(out - ref))))

    print("KERNEL_OK")
</pallas_src>

<mosaic_0001>
module attributes {stable_mosaic.version = 11 : i64} {
  func.func @kernel(%arg0: i32, %arg1: memref<32x128xf32, #tpu.memory_space<vmem>>, %arg2: memref<32x16xbf16, #tpu.memory_space<vmem>>, %arg3: memref<32x1xf32, #tpu.memory_space<vmem>>, %arg4: memref<16x32xbf16, #tpu.memory_space<vmem>>, %arg5: memref<16x1xf32, #tpu.memory_space<vmem>>, %arg6: memref<8x16xbf16, #tpu.memory_space<vmem>>, %arg7: memref<8x1xf32, #tpu.memory_space<vmem>>, %arg8: memref<8x1xf32, #tpu.memory_space<vmem>>, %arg9: memref<8x1xf32, #tpu.memory_space<vmem>>, %arg10: memref<1x1xf32, #tpu.memory_space<vmem>>, %arg11: memref<1x128xf32, #tpu.memory_space<vmem>>) attributes {dimension_semantics = [#tpu.dimension_semantics<parallel>], iteration_bounds = array<i64: 2>, scalar_prefetch = 0 : i64, scratch_operands = 0 : i64, tpu.core_type = #tpu.core_type<tc>, window_params = [{transform_indices = @transform_0, window_bounds = array<i64: 32, 128>}, {pipeline_mode = #tpu.pipeline_mode<synchronous>, transform_indices = @transform_1, window_bounds = array<i64: 32, 16>}, {pipeline_mode = #tpu.pipeline_mode<synchronous>, transform_indices = @transform_2, window_bounds = array<i64: 32, 1>}, {pipeline_mode = #tpu.pipeline_mode<synchronous>, transform_indices = @transform_3, window_bounds = array<i64: 16, 32>}, {pipeline_mode = #tpu.pipeline_mode<synchronous>, transform_indices = @transform_4, window_bounds = array<i64: 16, 1>}, {pipeline_mode = #tpu.pipeline_mode<synchronous>, transform_indices = @transform_5, window_bounds = array<i64: 8, 16>}, {pipeline_mode = #tpu.pipeline_mode<synchronous>, transform_indices = @transform_6, window_bounds = array<i64: 8, 1>}, {pipeline_mode = #tpu.pipeline_mode<synchronous>, transform_indices = @transform_7, window_bounds = array<i64: 8, 1>}, {pipeline_mode = #tpu.pipeline_mode<synchronous>, transform_indices = @transform_8, window_bounds = array<i64: 8, 1>}, {pipeline_mode = #tpu.pipeline_mode<synchronous>, transform_indices = @transform_9, window_bounds = array<i64: 1, 1>}, {transform_indices = @transform_10, window_bounds = array<i64: 1, 128>}]} {
    %c0 = arith.constant 0 : index
    %c0_0 = arith.constant 0 : index
    %0 = vector.load %arg1[%c0, %c0_0] : memref<32x128xf32, #tpu.memory_space<vmem>>, vector<8x128xf32>
    %c8 = arith.constant 8 : index
    %c0_1 = arith.constant 0 : index
    %1 = vector.load %arg1[%c8, %c0_1] : memref<32x128xf32, #tpu.memory_space<vmem>>, vector<8x128xf32>
    %2 = arith.mulf %0, %1 : vector<8x128xf32>
    %c16 = arith.constant 16 : index
    %c0_2 = arith.constant 0 : index
    %3 = vector.load %arg1[%c16, %c0_2] : memref<32x128xf32, #tpu.memory_space<vmem>>, vector<16x128xf32>
    %c0_3 = arith.constant 0 : index
    %c0_4 = arith.constant 0 : index
    %4 = vector.load %arg2[%c0_3, %c0_4] : memref<32x16xbf16, #tpu.memory_space<vmem>>, vector<32x16xbf16>
    %5 = arith.truncf %3 : vector<16x128xf32> to vector<16x128xbf16>
    %cst = arith.constant dense<0.000000e+00> : vector<32x128xf32>
    %6 = tpu.matmul %4, %5, %cst {dimension_numbers = #tpu.dot_dimension_numbers<[1], [0], [0], [1], [0, 0, 1, 1], [], []>} : vector<32x16xbf16>, vector<16x128xbf16>, vector<32x128xf32> -> vector<32x128xf32>
    %c0_5 = arith.constant 0 : index
    %c0_6 = arith.constant 0 : index
    %7 = vector.load %arg3[%c0_5, %c0_6] : memref<32x1xf32, #tpu.memory_space<vmem>>, vector<32x1xf32>
    %8 = vector.broadcast %7 : vector<32x1xf32> to vector<32x128xf32>
    %9 = arith.addf %6, %8 : vector<32x128xf32>
    %c0_7 = arith.constant 0 : index
    %c0_8 = arith.constant 0 : index
    %10 = vector.load %arg4[%c0_7, %c0_8] : memref<16x32xbf16, #tpu.memory_space<vmem>>, vector<16x32xbf16>
    %11 = arith.truncf %9 : vector<32x128xf32> to vector<32x128xbf16>
    %cst_9 = arith.constant dense<0.000000e+00> : vector<16x128xf32>
    %12 = tpu.matmul %10, %11, %cst_9 {dimension_numbers = #tpu.dot_dimension_numbers<[1], [0], [0], [1], [0, 0, 1, 1], [], []>} : vector<16x32xbf16>, vector<32x128xbf16>, vector<16x128xf32> -> vector<16x128xf32>
    %c0_10 = arith.constant 0 : index
    %c0_11 = arith.constant 0 : index
    %13 = vector.load %arg5[%c0_10, %c0_11] : memref<16x1xf32, #tpu.memory_space<vmem>>, vector<16x1xf32>
    %14 = vector.broadcast %13 : vector<16x1xf32> to vector<16x128xf32>
    %15 = arith.addf %12, %14 : vector<16x128xf32>
    %cst_12 = arith.constant 0.000000e+00 : f32
    %16 = vector.broadcast %cst_12 : f32 to vector<16x128xf32>
    %17 = arith.maximumf %15, %16 : vector<16x128xf32>
    %c0_13 = arith.constant 0 : index
    %c0_14 = arith.constant 0 : index
    %18 = vector.load %arg6[%c0_13, %c0_14] : memref<8x16xbf16, #tpu.memory_space<vmem>>, vector<8x16xbf16>
    %19 = arith.truncf %17 : vector<16x128xf32> to vector<16x128xbf16>
    %cst_15 = arith.constant dense<0.000000e+00> : vector<8x128xf32>
    %20 = tpu.matmul %18, %19, %cst_15 {dimension_numbers = #tpu.dot_dimension_numbers<[1], [0], [0], [1], [0, 0, 1, 1], [], []>} : vector<8x16xbf16>, vector<16x128xbf16>, vector<8x128xf32> -> vector<8x128xf32>
    %c0_16 = arith.constant 0 : index
    %c0_17 = arith.constant 0 : index
    %21 = vector.load %arg7[%c0_16, %c0_17] : memref<8x1xf32, #tpu.memory_space<vmem>>, vector<8x1xf32>
    %22 = vector.broadcast %21 : vector<8x1xf32> to vector<8x128xf32>
    %23 = arith.addf %20, %22 : vector<8x128xf32>
    %cst_18 = arith.constant 0.000000e+00 : f32
    %24 = vector.broadcast %cst_18 : f32 to vector<8x128xf32>
    %25 = arith.maximumf %23, %24 : vector<8x128xf32>
    %c0_19 = arith.constant 0 : index
    %c0_20 = arith.constant 0 : index
    %26 = vector.load %arg8[%c0_19, %c0_20] : memref<8x1xf32, #tpu.memory_space<vmem>>, vector<8x1xf32>
    %27 = vector.broadcast %26 : vector<8x1xf32> to vector<8x128xf32>
    %28 = arith.mulf %2, %27 : vector<8x128xf32>
    %cst_21 = arith.constant dense<0.000000e+00> : vector<128xf32>
    %29 = vector.multi_reduction <add>, %28, %cst_21 [0] : vector<8x128xf32> to vector<128xf32>
    %30 = vector.shape_cast %29 : vector<128xf32> to vector<1x128xf32>
    %c0_22 = arith.constant 0 : index
    %c0_23 = arith.constant 0 : index
    %31 = vector.load %arg9[%c0_22, %c0_23] : memref<8x1xf32, #tpu.memory_space<vmem>>, vector<8x1xf32>
    %32 = vector.broadcast %31 : vector<8x1xf32> to vector<8x128xf32>
    %33 = arith.mulf %25, %32 : vector<8x128xf32>
    %cst_24 = arith.constant dense<0.000000e+00> : vector<128xf32>
    %34 = vector.multi_reduction <add>, %33, %cst_24 [0] : vector<8x128xf32> to vector<128xf32>
    %35 = vector.shape_cast %34 : vector<128xf32> to vector<1x128xf32>
    %36 = arith.addf %30, %35 : vector<1x128xf32>
    %c0_25 = arith.constant 0 : index
    %c0_26 = arith.constant 0 : index
    %37 = vector.load %arg10[%c0_25, %c0_26] : memref<1x1xf32, #tpu.memory_space<vmem>>, vector<1x1xf32>
    %38 = vector.broadcast %37 : vector<1x1xf32> to vector<1x128xf32>
    %39 = arith.addf %36, %38 : vector<1x128xf32>
    %c0_27 = arith.constant 0 : index
    %c0_28 = arith.constant 0 : index
    %40 = vector.load %arg11[%c0_27, %c0_28] : memref<1x128xf32, #tpu.memory_space<vmem>>, vector<1x128xf32>
    tpu.vector_store %arg11[%c0_27, %c0_28], %39 {strides = array<i32>} : memref<1x128xf32, #tpu.memory_space<vmem>>, vector<1x128xf32>,
    return
  }
  func.func @transform_0(%arg0: i32) -> (i32, i32) {
    %c0_i32 = arith.constant 0 : i32
    %c0_i32_0 = arith.constant 0 : i32
    return %c0_i32, %arg0 : i32, i32
  }
  func.func @transform_1(%arg0: i32) -> (i32, i32) {
    %c0_i32 = arith.constant 0 : i32
    %c0_i32_0 = arith.constant 0 : i32
    %c0_i32_1 = arith.constant 0 : i32
    return %c0_i32, %c0_i32_0 : i32, i32
  }
  func.func @transform_2(%arg0: i32) -> (i32, i32) {
    %c0_i32 = arith.constant 0 : i32
    %c0_i32_0 = arith.constant 0 : i32
    %c0_i32_1 = arith.constant 0 : i32
    return %c0_i32, %c0_i32_0 : i32, i32
  }
  func.func @transform_3(%arg0: i32) -> (i32, i32) {
    %c0_i32 = arith.constant 0 : i32
    %c0_i32_0 = arith.constant 0 : i32
    %c0_i32_1 = arith.constant 0 : i32
    return %c0_i32, %c0_i32_0 : i32, i32
  }
  func.func @transform_4(%arg0: i32) -> (i32, i32) {
    %c0_i32 = arith.constant 0 : i32
    %c0_i32_0 = arith.constant 0 : i32
    %c0_i32_1 = arith.constant 0 : i32
    return %c0_i32, %c0_i32_0 : i32, i32
  }
  func.func @transform_5(%arg0: i32) -> (i32, i32) {
    %c0_i32 = arith.constant 0 : i32
    %c0_i32_0 = arith.constant 0 : i32
    %c0_i32_1 = arith.constant 0 : i32
    return %c0_i32, %c0_i32_0 : i32, i32
  }
  func.func @transform_6(%arg0: i32) -> (i32, i32) {
    %c0_i32 = arith.constant 0 : i32
    %c0_i32_0 = arith.constant 0 : i32
    %c0_i32_1 = arith.constant 0 : i32
    return %c0_i32, %c0_i32_0 : i32, i32
  }
  func.func @transform_7(%arg0: i32) -> (i32, i32) {
    %c0_i32 = arith.constant 0 : i32
    %c0_i32_0 = arith.constant 0 : i32
    %c0_i32_1 = arith.constant 0 : i32
    return %c0_i32, %c0_i32_0 : i32, i32
  }
  func.func @transform_8(%arg0: i32) -> (i32, i32) {
    %c0_i32 = arith.constant 0 : i32
    %c0_i32_0 = arith.constant 0 : i32
    %c0_i32_1 = arith.constant 0 : i32
    return %c0_i32, %c0_i32_0 : i32, i32
  }
  func.func @transform_9(%arg0: i32) -> (i32, i32) {
    %c0_i32 = arith.constant 0 : i32
    %c0_i32_0 = arith.constant 0 : i32
    %c0_i32_1 = arith.constant 0 : i32
    return %c0_i32, %c0_i32_0 : i32, i32
  }
  func.func @transform_10(%arg0: i32) -> (i32, i32) {
    %c0_i32 = arith.constant 0 : i32
    %c0_i32_0 = arith.constant 0 : i32
    return %c0_i32, %arg0 : i32, i32
  }
}

</mosaic_0001>

<llo_original>
// kernel: ncf_forward.1
$region0: #{ncf_forward.1}
  #allocation0 [shape = 'u32[]', space=smem, size = 0x4, offset = 0x4, fixed_abs, tag = 'smem constant byte address 0x4 - core index']
  #allocation1 [shape = 'u32[144,128]{1,0:T(1,128)}', space=vmem, size = 0x12000, scoped, tag = 'internal scratch']
  #allocation2 [shape = 'f32[1,1]{1,0:T(1,128)S(1)}', space=vmem, size = 0x200, scoped, tag = 'scoped memory for ncf_forward.1']
  %s0 = inlined_call_operand.vmem [shape: f32[32,256], index: 0, kind: input, shape index: {}]
  %s1 = inlined_call_operand.vmem [shape: bf16[32,16], index: 1, kind: input, shape index: {}]
  %s2 = inlined_call_operand.vmem [shape: f32[32,1], index: 2, kind: input, shape index: {}]
  %s3 = inlined_call_operand.vmem [shape: bf16[16,32], index: 3, kind: input, shape index: {}]
  %s4 = inlined_call_operand.vmem [shape: f32[16,1], index: 4, kind: input, shape index: {}]
  %s5 = inlined_call_operand.vmem [shape: bf16[8,16], index: 5, kind: input, shape index: {}]
  %s6 = inlined_call_operand.vmem [shape: f32[8,1], index: 6, kind: input, shape index: {}]
  %s7 = inlined_call_operand.vmem [shape: f32[8,1], index: 7, kind: input, shape index: {}]
  %s8 = inlined_call_operand.vmem [shape: f32[8,1], index: 8, kind: input, shape index: {}]
  %s9 = inlined_call_operand.<no memory space> [shape: f32[1,1], index: 9, kind: input, shape index: {}]
  %s10 = inlined_call_operand.hbm [shape: f32[1,256], index: 10, kind: output, shape index: {}]
  %s11 = sld [smem:[#allocation0]]
  $region111: #{ncf_forward.1} parent=0
    _
  %s13 = ssub.s32 1, %s11
  %s14 = scalar_select 0, %s13, %s11
  %v15 = vstv %s9
  %16 = vst [vmem:[#allocation2] sm:$0x1] %v15
  $region1: #{ncf_forward.1} parent=0
    #allocation3 [shape = 'u8[32768]{0}', space=vmem, size = 0x8000, scoped, tag = 'input window, operand 0']
    #allocation4 [shape = 'u8[1024]{0}', space=vmem, size = 0x400, scoped, tag = 'output window, operand 0']
    #allocation5 [shape = 's32[2]{0}', space=sflag, size = 0x8, scoped, tag = 'scoped memory for ncf_forward.1']
    %17 = vsyncpa [#allocation5], 0
    %s18 = scalar_lea.sflag [#allocation5], 1
    %19 = vsyncpa %s18, 0
    loop: start=0, step=1, limit=4
    $region2: #{ncf_forward.1} parent=1 // loop_pre_header
      _
    $region3: #{ncf_forward.1} parent=1 // loop_header
      %s21 = sphi 0, %s25
      %p22 = scmp.ge.s32.totalorder %s21, 4
      %s31 = sphi 0, %s33
      %s34 = sphi 0, %s31
      %s35 = sphi 0, %s34
      %s51 = sphi 0, %s35
      %s55 = sphi 0, %s55
      %s57 = sphi 0, %s55
      %s58 = sphi 0, %s57
      %s72 = sphi 0, %s58
      %s76 = sphi 0, %s76
      %s78 = sphi 0, %s76
      %s79 = sphi 0, %s78
      %s93 = sphi 0, %s79
      %s97 = sphi 0, %s97
      %s99 = sphi 0, %s97
      %s100 = sphi 0, %s99
      %s114 = sphi 0, %s100
      %s118 = sphi 0, %s118
      %s120 = sphi 0, %s118
      %s121 = sphi 0, %s120
      %s135 = sphi 0, %s121
      %s139 = sphi 0, %s139
      %s141 = sphi 0, %s139
      %s142 = sphi 0, %s141
      %s156 = sphi 0, %s142
      %s160 = sphi 0, %s160
      %s162 = sphi 0, %s160
      %s163 = sphi 0, %s162
      %s177 = sphi 0, %s163
      %s181 = sphi 0, %s181
      %s183 = sphi 0, %s181
      %s184 = sphi 0, %s183
      %s198 = sphi 0, %s184
      %s202 = sphi 0, %s202
      %s204 = sphi 0, %s202
      %s205 = sphi 0, %s204
      %s219 = sphi 0, %s205
      %s223 = sphi 0, %s223
      %s225 = sphi 0, %s223
      %s226 = sphi 0, %s225
      %s240 = sphi 0, %s226
      %s246 = sphi 0, %s248
      %s249 = sphi 0, %s246
      %s250 = sphi 0, %s249
      %s266 = sphi 0, %s250
    $region4: #{ncf_forward.1} parent=1 // loop_header_branch
      %24 = sbr.rel (%p22) target = $region8
    $region5: #{ncf_forward.1} parent=1 // loop_body
      %s26 = ssub.s32 %s21, 1
      %s27 = ssub.s32 %s21, 2
      %s28 = sadd.s32 %s21, 1
      %s29 = ssub.s32 %s21, %s28
      %p30 = scmp.eq.s32.totalorder %s29, 0
      %s32 = sadd.s32 %s31, 1
      %s33 = scalar_select %p30, %s31, %s32
      %p36 = pneg %p30
      %p37 = scmp.eq.s32.totalorder %s21, 1
      %p38 = por %p36, %p37
      %p39 = scmp.ne.s32.totalorder %s31, %s34
      %p40 = scmp.eq.s32.totalorder %s21, 0
      %p41 = por %p39, %p40
      %p42 = scmp.ne.s32.totalorder %s31, %s34
      %p43 = scmp.eq.s32.totalorder %s26, 1
      %p44 = por %p42, %p43
      %p45 = scmp.ne.s32.totalorder %s34, %s35
      %p46 = scmp.eq.s32.totalorder %s26, 0
      %p47 = por %p45, %p46
      %p48 = scmp.ne.s32.totalorder %s34, %s35
      %p49 = scmp.eq.s32.totalorder %s27, 1
      %p50 = por %p48, %p49
      %p52 = scmp.ne.s32.totalorder %s35, %s51
      %p53 = scmp.eq.s32.totalorder %s27, 0
      %p54 = por %p52, %p53
      %s56 = sadd.s32 %s55, 1
      %p59 = scmp.eq.s32.totalorder %s21, 1
      %p60 = scmp.ne.s32.totalorder %s55, %s57
      %p61 = scmp.eq.s32.totalorder %s21, 0
      %p62 = por %p60, %p61
      %p63 = scmp.ne.s32.totalorder %s55, %s57
      %p64 = scmp.eq.s32.totalorder %s26, 1
      %p65 = por %p63, %p64
      %p66 = scmp.ne.s32.totalorder %s57, %s58
      %p67 = scmp.eq.s32.totalorder %s26, 0
      %p68 = por %p66, %p67
      %p69 = scmp.ne.s32.totalorder %s57, %s58
      %p70 = scmp.eq.s32.totalorder %s27, 1
      %p71 = por %p69, %p70
      %p73 = scmp.ne.s32.totalorder %s58, %s72
      %p74 = scmp.eq.s32.totalorder %s27, 0
      %p75 = por %p73, %p74
      %s77 = sadd.s32 %s76, 1
      %p80 = scmp.eq.s32.totalorder %s21, 1
      %p81 = scmp.ne.s32.totalorder %s76, %s78
      %p82 = scmp.eq.s32.totalorder %s21, 0
      %p83 = por %p81, %p82
      %p84 = scmp.ne.s32.totalorder %s76, %s78
      %p85 = scmp.eq.s32.totalorder %s26, 1
      %p86 = por %p84, %p85
      %p87 = scmp.ne.s32.totalorder %s78, %s79
      %p88 = scmp.eq.s32.totalorder %s26, 0
      %p89 = por %p87, %p88
      %p90 = scmp.ne.s32.totalorder %s78, %s79
      %p91 = scmp.eq.s32.totalorder %s27, 1
      %p92 = por %p90, %p91
      %p94 = scmp.ne.s32.totalorder %s79, %s93
      %p95 = scmp.eq.s32.totalorder %s27, 0
      %p96 = por %p94, %p95
      %s98 = sadd.s32 %s97, 1
      %p101 = scmp.eq.s32.totalorder %s21, 1
      %p102 = scmp.ne.s32.totalorder %s97, %s99
      %p103 = scmp.eq.s32.totalorder %s21, 0
      %p104 = por %p102, %p103
      %p105 = scmp.ne.s32.totalorder %s97, %s99
      %p106 = scmp.eq.s32.totalorder %s26, 1
      %p107 = por %p105, %p106
      %p108 = scmp.ne.s32.totalorder %s99, %s100
      %p109 = scmp.eq.s32.totalorder %s26, 0
      %p110 = por %p108, %p109
      %p111 = scmp.ne.s32.totalorder %s99, %s100
      %p112 = scmp.eq.s32.totalorder %s27, 1
      %p113 = por %p111, %p112
      %p115 = scmp.ne.s32.totalorder %s100, %s114
      %p116 = scmp.eq.s32.totalorder %s27, 0
      %p117 = por %p115, %p116
      %s119 = sadd.s32 %s118, 1
      %p122 = scmp.eq.s32.totalorder %s21, 1
      %p123 = scmp.ne.s32.totalorder %s118, %s120
      %p124 = scmp.eq.s32.totalorder %s21, 0
      %p125 = por %p123, %p124
      %p126 = scmp.ne.s32.totalorder %s118, %s120
      %p127 = scmp.eq.s32.totalorder %s26, 1
      %p128 = por %p126, %p127
      %p129 = scmp.ne.s32.totalorder %s120, %s121
      %p130 = scmp.eq.s32.totalorder %s26, 0
      %p131 = por %p129, %p130
      %p132 = scmp.ne.s32.totalorder %s120, %s121
      %p133 = scmp.eq.s32.totalorder %s27, 1
      %p134 = por %p132, %p133
      %p136 = scmp.ne.s32.totalorder %s121, %s135
      %p137 = scmp.eq.s32.totalorder %s27, 0
      %p138 = por %p136, %p137
      %s140 = sadd.s32 %s139, 1
      %p143 = scmp.eq.s32.totalorder %s21, 1
      %p144 = scmp.ne.s32.totalorder %s139, %s141
      %p145 = scmp.eq.s32.totalorder %s21, 0
      %p146 = por %p144, %p145
      %p147 = scmp.ne.s32.totalorder %s139, %s141
      %p148 = scmp.eq.s32.totalorder %s26, 1
      %p149 = por %p147, %p148
      %p150 = scmp.ne.s32.totalorder %s141, %s142
      %p151 = scmp.eq.s32.totalorder %s26, 0
      %p152 = por %p150, %p151
      %p153 = scmp.ne.s32.totalorder %s141, %s142
      %p154 = scmp.eq.s32.totalorder %s27, 1
      %p155 = por %p153, %p154
      %p157 = scmp.ne.s32.totalorder %s142, %s156
      %p158 = scmp.eq.s32.totalorder %s27, 0
      %p159 = por %p157, %p158
      %s161 = sadd.s32 %s160, 1
      %p164 = scmp.eq.s32.totalorder %s21, 1
      %p165 = scmp.ne.s32.totalorder %s160, %s162
      %p166 = scmp.eq.s32.totalorder %s21, 0
      %p167 = por %p165, %p166
      %p168 = scmp.ne.s32.totalorder %s160, %s162
      %p169 = scmp.eq.s32.totalorder %s26, 1
      %p170 = por %p168, %p169
      %p171 = scmp.ne.s32.totalorder %s162, %s163
      %p172 = scmp.eq.s32.totalorder %s26, 0
      %p173 = por %p171, %p172
      %p174 = scmp.ne.s32.totalorder %s162, %s163
      %p175 = scmp.eq.s32.totalorder %s27, 1
      %p176 = por %p174, %p175
      %p178 = scmp.ne.s32.totalorder %s163, %s177
      %p179 = scmp.eq.s32.totalorder %s27, 0
      %p180 = por %p178, %p179
      %s182 = sadd.s32 %s181, 1
      %p185 = scmp.eq.s32.totalorder %s21, 1
      %p186 = scmp.ne.s32.totalorder %s181, %s183
      %p187 = scmp.eq.s32.totalorder %s21, 0
      %p188 = por %p186, %p187
      %p189 = scmp.ne.s32.totalorder %s181, %s183
      %p190 = scmp.eq.s32.totalorder %s26, 1
      %p191 = por %p189, %p190
      %p192 = scmp.ne.s32.totalorder %s183, %s184
      %p193 = scmp.eq.s32.totalorder %s26, 0
      %p194 = por %p192, %p193
      %p195 = scmp.ne.s32.totalorder %s183, %s184
      %p196 = scmp.eq.s32.totalorder %s27, 1
      %p197 = por %p195, %p196
      %p199 = scmp.ne.s32.totalorder %s184, %s198
      %p200 = scmp.eq.s32.totalorder %s27, 0
      %p201 = por %p199, %p200
      %s203 = sadd.s32 %s202, 1
      %p206 = scmp.eq.s32.totalorder %s21, 1
      %p207 = scmp.ne.s32.totalorder %s202, %s204
      %p208 = scmp.eq.s32.totalorder %s21, 0
      %p209 = por %p207, %p208
      %p210 = scmp.ne.s32.totalorder %s202, %s204
      %p211 = scmp.eq.s32.totalorder %s26, 1
      %p212 = por %p210, %p211
      %p213 = scmp.ne.s32.totalorder %s204, %s205
      %p214 = scmp.eq.s32.totalorder %s26, 0
      %p215 = por %p213, %p214
      %p216 = scmp.ne.s32.totalorder %s204, %s205
      %p217 = scmp.eq.s32.totalorder %s27, 1
      %p218 = por %p216, %p217
      %p220 = scmp.ne.s32.totalorder %s205, %s219
      %p221 = scmp.eq.s32.totalorder %s27, 0
      %p222 = por %p220, %p221
      %s224 = sadd.s32 %s223, 1
      %p227 = scmp.eq.s32.totalorder %s21, 1
      %p228 = scmp.ne.s32.totalorder %s223, %s225
      %p229 = scmp.eq.s32.totalorder %s21, 0
      %p230 = por %p228, %p229
      %p231 = scmp.ne.s32.totalorder %s223, %s225
      %p232 = scmp.eq.s32.totalorder %s26, 1
      %p233 = por %p231, %p232
      %p234 = scmp.ne.s32.totalorder %s225, %s226
      %p235 = scmp.eq.s32.totalorder %s26, 0
      %p236 = por %p234, %p235
      %p237 = scmp.ne.s32.totalorder %s225, %s226
      %p238 = scmp.eq.s32.totalorder %s27, 1
      %p239 = por %p237, %p238
      %p241 = scmp.ne.s32.totalorder %s226, %s240
      %p242 = scmp.eq.s32.totalorder %s27, 0
      %p243 = por %p241, %p242
      %s244 = ssub.s32 %s21, %s28
      %p245 = scmp.eq.s32.totalorder %s244, 0
      %s247 = sadd.s32 %s246, 1
      %s248 = scalar_select %p245, %s246, %s247
      %p251 = pneg %p245
      %p252 = scmp.eq.s32.totalorder %s21, 1
      %p253 = por %p251, %p252
      %p254 = scmp.ne.s32.totalorder %s246, %s249
      %p255 = scmp.eq.s32.totalorder %s21, 0
      %p256 = por %p254, %p255
      %p257 = scmp.ne.s32.totalorder %s246, %s249
      %p258 = scmp.eq.s32.totalorder %s26, 1
      %p259 = por %p257, %p258
      %p260 = scmp.ne.s32.totalorder %s249, %s250
      %p261 = scmp.eq.s32.totalorder %s26, 0
      %p262 = por %p260, %p261
      %p263 = scmp.ne.s32.totalorder %s249, %s250
      %p264 = scmp.eq.s32.totalorder %s27, 1
      %p265 = por %p263, %p264
      %p267 = scmp.ne.s32.totalorder %s250, %s266
      %p268 = scmp.eq.s32.totalorder %s27, 0
      %p269 = por %p267, %p268
      %p270 = scmp.le.s32.totalorder 1, %s21
      %p271 = scmp.lt.s32.totalorder %s21, 3
      %p272 = pnand %p270, %p271
      %p273 = pneg %p272
      // Predicated region
      $region9: #{ncf_forward.1} parent=5 // pred_check
        _
      $region10: #{ncf_forward.1} parent=5 // pred_check_branch
        %275 = sbr.rel (%p272) target = $region12
      $region11: #{ncf_forward.1} parent=5 // pred_region
        %s276 = ssub.s32 %s21, 1
        // Predicated region
        $region13: #{ncf_forward.1} parent=11 // pred_check
          %p277 = pneg %p68
        $region14: #{ncf_forward.1} parent=11 // pred_check_branch
          %279 = sbr.rel (%p277) target = $region16
        $region15: #{ncf_forward.1} parent=11 // pred_region
          _
        $region16: #{ncf_forward.1} parent=11 // pred_fallthru
          _
        // Predicated region
        $region17: #{ncf_forward.1} parent=11 // pred_check
          %p280 = pneg %p89
        $region18: #{ncf_forward.1} parent=11 // pred_check_branch
          %282 = sbr.rel (%p280) target = $region20
        $region19: #{ncf_forward.1} parent=11 // pred_region
          _
        $region20: #{ncf_forward.1} parent=11 // pred_fallthru
          _
        // Predicated region
        $region21: #{ncf_forward.1} parent=11 // pred_check
          %p283 = pneg %p110
        $region22: #{ncf_forward.1} parent=11 // pred_check_branch
          %285 = sbr.rel (%p283) target = $region24
        $region23: #{ncf_forward.1} parent=11 // pred_region
          _
        $region24: #{ncf_forward.1} parent=11 // pred_fallthru
          _
        // Predicated region
        $region25: #{ncf_forward.1} parent=11 // pred_check
          %p286 = pneg %p131
        $region26: #{ncf_forward.1} parent=11 // pred_check_branch
          %288 = sbr.rel (%p286) target = $region28
        $region27: #{ncf_forward.1} parent=11 // pred_region
          _
        $region28: #{ncf_forward.1} parent=11 // pred_fallthru
          _
        // Predicated region
        $region29: #{ncf_forward.1} parent=11 // pred_check
          %p289 = pneg %p152
        $region30: #{ncf_forward.1} parent=11 // pred_check_branch
          %291 = sbr.rel (%p289) target = $region32
        $region31: #{ncf_forward.1} parent=11 // pred_region
          _
        $region32: #{ncf_forward.1} parent=11 // pred_fallthru
          _
        // Predicated region
        $region33: #{ncf_forward.1} parent=11 // pred_check
          %p292 = pneg %p173
        $region34: #{ncf_forward.1} parent=11 // pred_check_branch
          %294 = sbr.rel (%p292) target = $region36
        $region35: #{ncf_forward.1} parent=11 // pred_region
          _
        $region36: #{ncf_forward.1} parent=11 // pred_fallthru
          _
        // Predicated region
        $region37: #{ncf_forward.1} parent=11 // pred_check
          %p295 = pneg %p194
        $region38: #{ncf_forward.1} parent=11 // pred_check_branch
          %297 = sbr.rel (%p295) target = $region40
        $region39: #{ncf_forward.1} parent=11 // pred_region
          _
        $region40: #{ncf_forward.1} parent=11 // pred_fallthru
          _
        // Predicated region
        $region41: #{ncf_forward.1} parent=11 // pred_check
          %p298 = pneg %p215
        $region42: #{ncf_forward.1} parent=11 // pred_check_branch
          %300 = sbr.rel (%p298) target = $region44
        $region43: #{ncf_forward.1} parent=11 // pred_region
          _
        $region44: #{ncf_forward.1} parent=11 // pred_fallthru
          _
        // Predicated region
        $region45: #{ncf_forward.1} parent=11 // pred_check
          %p301 = pneg %p236
        $region46: #{ncf_forward.1} parent=11 // pred_check_branch
          %303 = sbr.rel (%p301) target = $region48
        $region47: #{ncf_forward.1} parent=11 // pred_region
          _
        $region48: #{ncf_forward.1} parent=11 // pred_fallthru
          _
      $region12: #{ncf_forward.1} parent=5 // pred_fallthru
        _
      %p304 = scmp.lt.s32.totalorder %s21, 2
      // Predicated region
      $region49: #{ncf_forward.1} parent=5 // pred_check
        %p305 = pneg %p304
      $region50: #{ncf_forward.1} parent=5 // pred_check_branch
        %307 = sbr.rel (%p305) target = $region52
      $region51: #{ncf_forward.1} parent=5 // pred_region
        // Predicated region
        $region53: #{ncf_forward.1} parent=51 // pred_check
          %p308 = pneg %p41
        $region54: #{ncf_forward.1} parent=51 // pred_check_branch
          %310 = sbr.rel (%p308) target = $region56
        $region55: #{ncf_forward.1} parent=51 // pred_region
          %s311 = sand.u32 %s31, 1
          %s312 = sand.u32 %s31, 1
          %s313 = smul.addr %s312, 32
          %s314 = scalar_lea.vmem [#allocation3], %s313
          %s315 = smul.addr %s21, 8
          %s316 = scalar_lea.vmem %s0, %s315
          // Predicated region
          $region57: #{ncf_forward.1} parent=55 // pred_check
            _
          $region58: #{ncf_forward.1} parent=55 // pred_check_branch
            %318 = sbr.rel (0) target = $region60
          $region59: #{ncf_forward.1} parent=55 // pred_region
            // Predicated region
            $region61: #{ncf_forward.1} parent=59 // pred_check
              _
            $region62: #{ncf_forward.1} parent=59 // pred_check_branch
              %320 = sbr.rel (0) target = $region64
            $region63: #{ncf_forward.1} parent=59 // pred_region
              // Predicated region
              $region76: #{ncf_forward.1} parent=63 // pred_check
                _
              $region77: #{ncf_forward.1} parent=63 // pred_check_branch
                %341 = sbr.rel (0) target = $region79
              $region78: #{ncf_forward.1} parent=63 // pred_region
                loop: start=0, step=1, limit=1
                $region80: #{ncf_forward.1} parent=78 // loop_pre_header
                  _
                $region81: #{ncf_forward.1} parent=78 // loop_header
                  %s343 = sphi 0, %s347
                  %p344 = scmp.ge.s32.totalorder %s343, 1
                  %s348 = sphi %s316, %s316
                  %s349 = sphi %s314, %s314
                $region82: #{ncf_forward.1} parent=78 // loop_header_branch
                  %346 = sbr.rel (%p344) target = $region86
                $region83: #{ncf_forward.1} parent=78 // loop_body
                  %v350 = vld [vmem:[%s348] sm:$0xff]
                  %351 = vst [vmem:[%s349] sm:$0xff] %v350
                  %v352 = vld [vmem:[%s348 + $0x10] sm:$0xff]
                  %353 = vst [vmem:[%s349 + $0x8] sm:$0xff] %v352
                  %v354 = vld [vmem:[%s348 + $0x20] sm:$0xff]
                  %355 = vst [vmem:[%s349 + $0x10] sm:$0xff] %v354
                  %v356 = vld [vmem:[%s348 + $0x30] sm:$0xff]
                  %357 = vst [vmem:[%s349 + $0x18] sm:$0xff] %v356
                $region84: #{ncf_forward.1} parent=78 // loop_footer
                  %s347 = sadd.s32 1, %s343
                $region85: #{ncf_forward.1} parent=78 // loop_footer_branch
                  %342 = sbr.rel target = $region81
                $region86: #{ncf_forward.1} parent=78 // loop_exit
                  _
              $region79: #{ncf_forward.1} parent=63 // pred_fallthru
                _
              // Predicated region
              $region87: #{ncf_forward.1} parent=63 // pred_check
                _
              $region88: #{ncf_forward.1} parent=63 // pred_check_branch
                %359 = sbr.rel target = $region90
              $region89: #{ncf_forward.1} parent=63 // pred_region
                _
              $region90: #{ncf_forward.1} parent=63 // pred_fallthru
                _
            $region64: #{ncf_forward.1} parent=59 // pred_fallthru
              _
            // Predicated region
            $region65: #{ncf_forward.1} parent=59 // pred_check
              _
            $region66: #{ncf_forward.1} parent=59 // pred_check_branch
              %322 = sbr.rel target = $region68
            $region67: #{ncf_forward.1} parent=59 // pred_region
              loop: start=0, step=1, limit=1
              $region69: #{ncf_forward.1} parent=67 // loop_pre_header
                _
              $region70: #{ncf_forward.1} parent=67 // loop_header
                %s325 = sphi 0, %s329
                %p326 = scmp.ge.s32.totalorder %s325, 1
                %s330 = sphi %s316, %s316
                %s331 = sphi %s314, %s314
              $region71: #{ncf_forward.1} parent=67 // loop_header_branch
                %328 = sbr.rel (%p326) target = $region75
              $region72: #{ncf_forward.1} parent=67 // loop_body
                %v332 = vld [vmem:[%s330] sm:$0xff]
                %333 = vst [vmem:[%s331] sm:$0xff] %v332
                %v334 = vld [vmem:[%s330 + $0x10] sm:$0xff]
                %335 = vst [vmem:[%s331 + $0x8] sm:$0xff] %v334
                %v336 = vld [vmem:[%s330 + $0x20] sm:$0xff]
                %337 = vst [vmem:[%s331 + $0x10] sm:$0xff] %v336
                %v338 = vld [vmem:[%s330 + $0x30] sm:$0xff]
                %339 = vst [vmem:[%s331 + $0x18] sm:$0xff] %v338
              $region73: #{ncf_forward.1} parent=67 // loop_footer
                %s329 = sadd.s32 1, %s325
              $region74: #{ncf_forward.1} parent=67 // loop_footer_branch
                %324 = sbr.rel target = $region70
              $region75: #{ncf_forward.1} parent=67 // loop_exit
                _
            $region68: #{ncf_forward.1} parent=59 // pred_fallthru
              _
          $region60: #{ncf_forward.1} parent=55 // pred_fallthru
            _
          %360 = vnop
        $region56: #{ncf_forward.1} parent=51 // pred_fallthru
          _
      $region52: #{ncf_forward.1} parent=5 // pred_fallthru
        _
      %p361 = scmp.le.s32.totalorder 1, %s21
      %p362 = scmp.lt.s32.totalorder %s21, 3
      %p363 = pnand %p361, %p362
      %p364 = pneg %p363
      // Predicated region
      $region91: #{ncf_forward.1} parent=5 // pred_check
        _
      $region92: #{ncf_forward.1} parent=5 // pred_check_branch
        %366 = sbr.rel (%p363) target = $region94
      $region93: #{ncf_forward.1} parent=5 // pred_region
        %s367 = ssub.s32 %s21, 1
        %s368 = sand.u32 %s34, 1
        %s369 = sand.u32 %s34, 1
        %s370 = smul.addr %s369, 32
        %s371 = scalar_lea.vmem [#allocation3], %s370
        // Predicated region
        $region95: #{ncf_forward.1} parent=93 // pred_check
          %p372 = pneg %p47
        $region96: #{ncf_forward.1} parent=93 // pred_check_branch
          %374 = sbr.rel (%p372) target = $region98
        $region97: #{ncf_forward.1} parent=93 // pred_region
          _
        $region98: #{ncf_forward.1} parent=93 // pred_fallthru
          _
        %s375 = sand.u32 %s34, 1
        %s376 = sand.u32 %s34, 1
        %s377 = smul.addr %s376, 32
        %s378 = scalar_lea.vmem [#allocation3], %s377
        %p379 = pneg %p47
        %p380 = pneg %p44
        %p381 = pneg %p68
        %p382 = pneg %p65
        %p383 = pneg %p89
        %p384 = pneg %p86
        %p385 = pneg %p110
        %p386 = pneg %p107
        %p387 = pneg %p131
        %p388 = pneg %p128
        %p389 = pneg %p152
        %p390 = pneg %p149
        %p391 = pneg %p173
        %p392 = pneg %p170
        %p393 = pneg %p194
        %p394 = pneg %p191
        %p395 = pneg %p215
        %p396 = pneg %p212
        %p397 = pneg %p236
        %p398 = pneg %p233
        %p399 = pneg %p262
        %p400 = pneg %p259
        %s401 = sand.u32 %s249, 1
        %s402 = scalar_lea.sflag [#allocation5], %s401
        %s403 = sand.u32 %s249, 1
        %s404 = scalar_lea.vmem [#allocation4], %s403
        %v406 = vld [vmem:[%s371] sm:$0xff]
        %v407 = vld [vmem:[%s371 + $0x8] sm:$0xff]
        %v408 = vmul.f32 %v406, %v407
        %v409 = vld [vmem:[%s371 + $0x10] sm:$0xff]
        %v410 = vld [vmem:[%s371 + $0x18] sm:$0xff]
        %v411 = vld [vmem:[%s1] sm:$0xf]
        %v412 = vld [vmem:[%s1 + $0x4] sm:$0xf]
        %v413 = vld [vmem:[%s1 + $0x8] sm:$0xf]
        %v414 = vld [vmem:[%s1 + $0xc] sm:$0xf]
        %v415 = vpack.c.bf16 %v410, %v409
        %v416 = vld [vmem:[%s2] sm:$0xff]
        %v417 = vld [vmem:[%s2 + $0x8] sm:$0xff]
        %v418 = vld [vmem:[%s2 + $0x10] sm:$0xff]
        %v419 = vld [vmem:[%s2 + $0x18] sm:$0xff]
        %421 = vset.pattern.permute.xlu0 0
        %422 = vperm.xlu0 %421, %v416
        %v423 = vpop.permute.xlu0 %422
        %426 = vset.pattern.permute.xlu0 0
        %427 = vperm.xlu0 %426, %v417
        %v428 = vpop.permute.xlu0 %427
        %431 = vset.pattern.permute.xlu0 0
        %432 = vperm.xlu0 %431, %v418
        %v433 = vpop.permute.xlu0 %432
        %436 = vset.pattern.permute.xlu0 0
        %437 = vperm.xlu0 %436, %v419
        %v438 = vpop.permute.xlu0 %437
        %v444 = vunpack.c.l.b16 %v411
        %v445 = vunpack.c.l.b16 %v412
        %v446 = vunpack.c.l.b16 %v413
        %v447 = vunpack.c.l.b16 %v414
        %v448 = vpack.c.b16 %v445, %v444
        %v449 = vpack.c.b16 %v447, %v446
        %vm450 = vcmask 130048
        %v452 = vsel %vm450, %v448, 0
        %v455 = vsel %vm450, %v449, 0
        %457 = vmatprep.subr.bf16.mxu0 0
        %458 = vmatpush1.bf16.msra.mxu0 %v415
        %459 = vmatprep.subr.bf16.mxu0 0
        %460 = vmatpush1.bf16.msra.mxu0 0
        %461 = vmatprep.subr.bf16.mxu0 0
        %462 = vmatpush1.bf16.msra.mxu0 0
        %463 = vmatprep.subr.bf16.mxu0 0
        %464 = vmatpush1.bf16.msra.mxu0 0
        %465 = vmatprep.subr.bf16.mxu0 0
        %466 = vmatpush1.bf16.msra.mxu0 0
        %467 = vmatprep.subr.bf16.mxu0 0
        %468 = vmatpush1.bf16.msra.mxu0 0
        %469 = vmatprep.subr.bf16.mxu0 0
        %470 = vmatpush1.bf16.msra.mxu0 0
        %471 = vmatprep.subr.bf16.mxu0 0
        %472 = vmatpush1.bf16.msra.mxu0 0
        %473 = vmatprep.subr.bf16.mxu0 0
        %474 = vmatpush1.bf16.msra.mxu0 0
        %475 = vmatprep.subr.bf16.mxu0 0
        %476 = vmatpush1.bf16.msra.mxu0 0
        %477 = vmatprep.subr.bf16.mxu0 0
        %478 = vmatpush1.bf16.msra.mxu0 0
        %479 = vmatprep.subr.bf16.mxu0 0
        %480 = vmatpush1.bf16.msra.mxu0 0
        %481 = vmatprep.subr.bf16.mxu0 0
        %482 = vmatpush1.bf16.msra.mxu0 0
        %483 = vmatprep.subr.bf16.mxu0 0
        %484 = vmatpush1.bf16.msra.mxu0 0
        %485 = vmatprep.subr.bf16.mxu0 0
        %486 = vmatpush1.bf16.msra.mxu0 0
        %487 = vmatprep.subr.bf16.mxu0 0
        %488 = vmatpush1.bf16.msra.mxu0 0
        %489 = vmatprep.mubr.bf16.mxu0 0
        %490 = vmatmul.mubr.bf16.gmra.mrb[0].mxu0 %v452
        %v491 = vpop.f32.mrb[0].mxu0
        %v492 = vadd.f32 %v423, %v491
        %v493 = vpop.f32.mrb[0].mxu0
        %v494 = vpop.f32.mrb[0].mxu0
        %v495 = vadd.f32 %v428, %v494
        %v496 = vpop.f32.mrb[0].mxu0
        %497 = vmatprep.mubr.bf16.mxu0 0
        %498 = vmatmul.mubr.bf16.gmra.mrb[0].mxu0 %v455
        %v499 = vpop.f32.mrb[0].mxu0
        %v500 = vadd.f32 %v433, %v499
        %v501 = vpop.f32.mrb[0].mxu0
        %v502 = vpop.f32.mrb[0].mxu0
        %v503 = vadd.f32 %v438, %v502
        %v504 = vpop.f32.mrb[0].mxu0
        %505 = vdwg.mxu0
        %v506 = vld [vmem:[%s3] sm:$0xf]
        %v507 = vld [vmem:[%s3 + $0x4] sm:$0xf]
        %v508 = vpack.c.bf16 %v495, %v492
        %v509 = vpack.c.bf16 %v503, %v500
        %v510 = vld [vmem:[%s4] sm:$0xff]
        %v511 = vld [vmem:[%s4 + $0x8] sm:$0xff]
        %513 = vset.pattern.permute.xlu0 0
        %514 = vperm.xlu0 %513, %v510
        %v515 = vpop.permute.xlu0 %514
        %518 = vset.pattern.permute.xlu0 0
        %519 = vperm.xlu0 %518, %v511
        %v520 = vpop.permute.xlu0 %519
        %v524 = vunpack.c.l.b16 %v506
        %v525 = vunpack.c.l.b16 %v507
        %v526 = vpack.c.b16 %v525, %v524
        %vm527 = vcmask 261120
        %v529 = vsel %vm527, %v526, 0
        %531 = vmatprep.subr.bf16.mxu0 0
        %532 = vmatpush1.bf16.msra.mxu0 %v508
        %533 = vmatprep.subr.bf16.mxu0 0
        %534 = vmatpush1.bf16.msra.mxu0 %v509
        %535 = vmatprep.subr.bf16.mxu0 0
        %536 = vmatpush1.bf16.msra.mxu0 0
        %537 = vmatprep.subr.bf16.mxu0 0
        %538 = vmatpush1.bf16.msra.mxu0 0
        %539 = vmatprep.subr.bf16.mxu0 0
        %540 = vmatpush1.bf16.msra.mxu0 0
        %541 = vmatprep.subr.bf16.mxu0 0
        %542 = vmatpush1.bf16.msra.mxu0 0
        %543 = vmatprep.subr.bf16.mxu0 0
        %544 = vmatpush1.bf16.msra.mxu0 0
        %545 = vmatprep.subr.bf16.mxu0 0
        %546 = vmatpush1.bf16.msra.mxu0 0
        %547 = vmatprep.subr.bf16.mxu0 0
        %548 = vmatpush1.bf16.msra.mxu0 0
        %549 = vmatprep.subr.bf16.mxu0 0
        %550 = vmatpush1.bf16.msra.mxu0 0
        %551 = vmatprep.subr.bf16.mxu0 0
        %552 = vmatpush1.bf16.msra.mxu0 0
        %553 = vmatprep.subr.bf16.mxu0 0
        %554 = vmatpush1.bf16.msra.mxu0 0
        %555 = vmatprep.subr.bf16.mxu0 0
        %556 = vmatpush1.bf16.msra.mxu0 0
        %557 = vmatprep.subr.bf16.mxu0 0
        %558 = vmatpush1.bf16.msra.mxu0 0
        %559 = vmatprep.subr.bf16.mxu0 0
        %560 = vmatpush1.bf16.msra.mxu0 0
        %561 = vmatprep.subr.bf16.mxu0 0
        %562 = vmatpush1.bf16.msra.mxu0 0
        %563 = vmatprep.mubr.bf16.mxu0 0
        %564 = vmatmul.mubr.bf16.gmra.mrb[0].mxu0 %v529
        %v565 = vpop.f32.mrb[0].mxu0
        %v566 = vadd.f32 %v515, %v565
        %v567 = vpop.f32.mrb[0].mxu0
        %v568 = vpop.f32.mrb[0].mxu0
        %v569 = vadd.f32 %v520, %v568
        %v570 = vpop.f32.mrb[0].mxu0
        %571 = vdwg.mxu0
        %v572 = vmax.f32 %v566, 0.0
        %v573 = vmax.f32 %v569, 0.0
        %v574 = vld [vmem:[%s5] sm:$0xf]
        %v575 = vpack.c.bf16 %v573, %v572
        %v576 = vld [vmem:[%s6] sm:$0xff]
        %578 = vset.pattern.permute.xlu0 0
        %579 = vperm.xlu0 %578, %v576
        %v580 = vpop.permute.xlu0 %579
        %v583 = vsel %vm450, %v574, 0
        %585 = vmatprep.subr.bf16.mxu0 0
        %586 = vmatpush1.bf16.msra.mxu0 %v575
        %587 = vmatprep.subr.bf16.mxu0 0
        %588 = vmatpush1.bf16.msra.mxu0 0
        %589 = vmatprep.subr.bf16.mxu0 0
        %590 = vmatpush1.bf16.msra.mxu0 0
        %591 = vmatprep.subr.bf16.mxu0 0
        %592 = vmatpush1.bf16.msra.mxu0 0
        %593 = vmatprep.subr.bf16.mxu0 0
        %594 = vmatpush1.bf16.msra.mxu0 0
        %595 = vmatprep.subr.bf16.mxu0 0
        %596 = vmatpush1.bf16.msra.mxu0 0
        %597 = vmatprep.subr.bf16.mxu0 0
        %598 = vmatpush1.bf16.msra.mxu0 0
        %599 = vmatprep.subr.bf16.mxu0 0
        %600 = vmatpush1.bf16.msra.mxu0 0
        %601 = vmatprep.subr.bf16.mxu0 0
        %602 = vmatpush1.bf16.msra.mxu0 0
        %603 = vmatprep.subr.bf16.mxu0 0
        %604 = vmatpush1.bf16.msra.mxu0 0
        %605 = vmatprep.subr.bf16.mxu0 0
        %606 = vmatpush1.bf16.msra.mxu0 0
        %607 = vmatprep.subr.bf16.mxu0 0
        %608 = vmatpush1.bf16.msra.mxu0 0
        %609 = vmatprep.subr.bf16.mxu0 0
        %610 = vmatpush1.bf16.msra.mxu0 0
        %611 = vmatprep.subr.bf16.mxu0 0
        %612 = vmatpush1.bf16.msra.mxu0 0
        %613 = vmatprep.subr.bf16.mxu0 0
        %614 = vmatpush1.bf16.msra.mxu0 0
        %615 = vmatprep.subr.bf16.mxu0 0
        %616 = vmatpush1.bf16.msra.mxu0 0
        %617 = vmatprep.mubr.bf16.mxu0 0
        %618 = vmatmul.mubr.bf16.gmra.mrb[0].mxu0 %v583
        %v619 = vpop.f32.mrb[0].mxu0
        %v620 = vadd.f32 %v580, %v619
        %v621 = vpop.f32.mrb[0].mxu0
        %v622 = vpop.f32.mrb[0].mxu0
        %v623 = vpop.f32.mrb[0].mxu0
        %624 = vdwg.mxu0
        %v625 = vmax.f32 %v620, 0.0
        %v626 = vld [vmem:[%s7] sm:$0xff]
        %628 = vset.pattern.permute.xlu0 0
        %629 = vperm.xlu0 %628, %v626
        %v630 = vpop.permute.xlu0 %629
        %v632 = vmul.f32 %v408, %v630
        %v633 = vrot.slane %v632, 4
        %v634 = vadd.f32 %v632, %v633
        %v635 = vrot.slane %v634, 2
        %v636 = vadd.f32 %v634, %v635
        %v637 = vrot.slane %v636, 1
        %v638 = vadd.f32 %v636, %v637
        %v639 = vld [vmem:[%s8] sm:$0xff]
        %641 = vset.pattern.permute.xlu0 0
        %642 = vperm.xlu0 %641, %v639
        %v643 = vpop.permute.xlu0 %642
        %v645 = vmul.f32 %v625, %v643
        %v646 = vrot.slane %v645, 4
        %v647 = vadd.f32 %v645, %v646
        %v648 = vrot.slane %v647, 2
        %v649 = vadd.f32 %v647, %v648
        %v650 = vrot.slane %v649, 1
        %v651 = vadd.f32 %v649, %v650
        %v652 = vadd.f32 %v638, %v651
        %v653 = vld [vmem:[#allocation2] sm:$0x1]
        %655 = vset.pattern.permute.xlu0 0
        %656 = vperm.xlu0 %655, %v653
        %v657 = vpop.permute.xlu0 %656
        %v659 = vlaneseq
        %v660 = vshrl.u32 %v659, 7
        %v661 = vsub.s32 0, %v660
        %v662 = vrot.slane %v657, %v661
        %v663 = vadd.f32 %v652, %v662
        %664 = vst [vmem:[%s404] sm:$0x1] %v663
        %s665 = sand.u32 %s249, 1
        %s666 = scalar_lea.sflag [#allocation5], %s665
        %s667 = sand.u32 %s249, 1
        %s668 = scalar_lea.vmem [#allocation4], %s667
        // Predicated region
        $region99: #{ncf_forward.1} parent=93 // pred_check
          %p669 = pneg %p259
        $region100: #{ncf_forward.1} parent=93 // pred_check_branch
          %671 = sbr.rel (%p669) target = $region102
        $region101: #{ncf_forward.1} parent=93 // pred_region
          %s673 = ssub.s32 16, 16
          %674 = vsyncadd %s666, %s673
          %s675 = smul.addr %s26, 16
          %s676 = scalar_lea.hbm %s10, %s675
          %s678 = sshll.u32 %s668, 4
          %s679 = int_to_ptr.vmem [resolvable:$true] %s678
          %681 = dma.vmem_to_hbm [thread:$0]  %s679, 16, %s676, %s666
        $region102: #{ncf_forward.1} parent=93 // pred_fallthru
          _
      $region94: #{ncf_forward.1} parent=5 // pred_fallthru
        _
      %p682 = scmp.le.s32.totalorder 2, %s21
      // Predicated region
      $region103: #{ncf_forward.1} parent=5 // pred_check
        %p683 = pneg %p682
      $region104: #{ncf_forward.1} parent=5 // pred_check_branch
        %685 = sbr.rel (%p683) target = $region106
      $region105: #{ncf_forward.1} parent=5 // pred_region
        %s686 = ssub.s32 %s21, 2
        // Predicated region
        $region107: #{ncf_forward.1} parent=105 // pred_check
          %p687 = pneg %p265
        $region108: #{ncf_forward.1} parent=105 // pred_check_branch
          %689 = sbr.rel (%p687) target = $region110
        $region109: #{ncf_forward.1} parent=105 // pred_region
          %s690 = sand.u32 %s250, 1
          %s691 = scalar_lea.sflag [#allocation5], %s690
          %s692 = sand.u32 %s250, 1
          %s693 = scalar_lea.vmem [#allocation4], %s692
          %694 = dma.done %s691, 16
        $region110: #{ncf_forward.1} parent=105 // pred_fallthru
          _
      $region106: #{ncf_forward.1} parent=5 // pred_fallthru
        _
    $region6: #{ncf_forward.1} parent=1 // loop_footer
      %s25 = sadd.s32 1, %s21
    $region7: #{ncf_forward.1} parent=1 // loop_footer_branch
      %20 = sbr.rel target = $region3
    $region8: #{ncf_forward.1} parent=1 // loop_exit
      _
    %695 = vsyncpa [#allocation5], 1
    %s696 = scalar_lea.sflag [#allocation5], 1
    %697 = vsyncpa %s696, 1

</llo_original>
